<compile_context>
chip_gen: v5e
topology: v5e:2x2
jax: 0.10.0
libtpu: 0.0.40
codegen_flags: <defaults>
</compile_context>

<pallas_src>
import functools

import jax
import jax.numpy as jnp
import numpy as np
from jax.experimental import pallas as pl
from jax.experimental.pallas import tpu as pltpu

_LANE = 128
_CE_TILE_ROWS = 3072            # 3072*128*4 B = 1.5 MiB of logits per grid step
_MSE_TILE_ROWS = 2048           # 1 MiB per input per grid step
_MSE_PALLAS_MIN = 1 << 16       # below this, let XLA fuse the squared-diff reduce
_VMEM_LIMIT = 48 * 1024 * 1024  # fits v7x (64 MiB physical) with headroom


def _round_up(x: int, m: int) -> int:
    return (x + m - 1) // m * m


def _cdiv(a: int, b: int) -> int:
    return (a + b - 1) // b


# ---------------------------------------------------------------------------
# Cross-entropy kernel.
#
# Layout: logits are row-major, flattened to [rows, 128] so every 128-lane vreg
# row holds 128/C consecutive samples (class index is the minor, lane-contiguous
# axis).  Per-sample max / sum-of-exp are computed with pltpu.roll segmented
# reductions over each aligned C-lane group; the roll direction is probed at
# runtime so the kernel is correct under either rotation convention.  Each grid
# step emits (1, 128) lane partials of sum(logsumexp) - sum(target_logit);
# padded / out-of-bounds lanes are masked before the reduction.
# ---------------------------------------------------------------------------
def _ce_partials_kernel(logits_ref, onehot_ref, out_ref, *,
                        num_classes, n_valid, tile_rows):
    i = pl.program_id(0)
    x = logits_ref[...].astype(jnp.float32)                  # (R, 128)
    r, l = x.shape

    lane = jax.lax.broadcasted_iota(jnp.int32, (r, l), 1)
    row = jax.lax.broadcasted_iota(jnp.int32, (r, l), 0)

    # Probe pltpu.roll's rotation direction once per tile (one vreg of work):
    # fwd == 1  <=>  roll(v, l-1, axis=1)[..., j] == v[..., (j+1) % l].
    probe_src = jax.lax.broadcasted_iota(jnp.int32, (8, l), 1).astype(jnp.float32)
    probe = pltpu.roll(probe_src, shift=l - 1, axis=1)
    fwd = (probe[0:1, 0:1] == 1.0).astype(jnp.int32)          # (1, 1) in {0, 1}

    # Per-sample max over each aligned group of `num_classes` lanes
    # (XOR butterfly: after log2(C) stages every lane holds its group's max).
    m = x
    d, bit_pos = 1, 0
    while d < num_classes:
        up = pltpu.roll(m, shift=l - d, axis=1)   # m[j+d] if fwd else m[j-d]
        dn = pltpu.roll(m, shift=d, axis=1)       # m[j-d] if fwd else m[j+d]
        bit = (lane >> bit_pos) & 1               # 0 => partner lane is j+d
        m = jnp.maximum(m, jnp.where((bit ^ fwd) == 1, up, dn))
        d *= 2
        bit_pos += 1

    # Per-sample sum of exp via one-directional sliding sums; the complete
    # group sum lands on the group's first lane if fwd else on its last lane.
    e = jnp.exp(x - m)
    s = e
    d = 1
    while d < num_classes:
        s = s + pltpu.roll(s, shift=l - d, axis=1)
        d *= 2
    lse = m + jnp.log(s)
    head = (1 - fwd) * (num_classes - 1)                      # (1, 1) int32

    flat = (i * tile_rows + row) * l + lane                   # flat element index
    valid = flat < n_valid
    at_head = (lane & (num_classes - 1)) == head
    lse_term = jnp.where(valid & at_head, lse, 0.0)
    tgt_term = jnp.where(valid & (onehot_ref[...] != 0), x, 0.0)

    out_ref[...] = jnp.sum(lse_term - tgt_term, axis=0, keepdims=True)


def _cross_entropy_mean(y_pred, y_true):
    """mean_i CE(y_pred[i], y_true[i])  ==  nn.CrossEntropyLoss()(y_pred, y_true)."""
    n, c = y_pred.shape
    if (c & (c - 1)) != 0 or not (2 <= c <= _LANE):
        # TODO(synk): class-tiled online-logsumexp kernel for vocab-scale /
        # non-power-of-two C; fall back to XLA here.
        logp = jax.nn.log_softmax(y_pred.astype(jnp.float32), axis=-1)
        onehot = jax.nn.one_hot(y_true, c, dtype=jnp.float32)
        return -jnp.mean(jnp.sum(logp * onehot, axis=-1))

    flat_n = n * c
    tail = (-flat_n) % _LANE

    logits_flat = y_pred.reshape(flat_n)                      # contiguous reshape: free
    onehot_flat = (y_true.reshape(n, 1).astype(jnp.int32) ==
                   jnp.arange(c, dtype=jnp.int32).reshape(1, c)).astype(jnp.int8)
    onehot_flat = onehot_flat.reshape(flat_n)
    if tail:                                                  # ragged (<128) tail only
        logits_flat = jnp.pad(logits_flat, (0, tail))
        onehot_flat = jnp.pad(onehot_flat, (0, tail))

    rows = (flat_n + tail) // _LANE
    if rows <= 256:
        tile_rows = rows                                      # single full-array block
    else:
        # >=2 tiles so the "parallel" axis can feed both v7x TensorCores; cap the
        # tile at ~1.5 MiB of logits so double-buffered inputs + temporaries stay
        # well inside the scoped-VMEM budget on all generations.
        tile_rows = min(_CE_TILE_ROWS, _round_up(_cdiv(rows, 2), 32))
    num_tiles = _cdiv(rows, tile_rows)

    logits2d = logits_flat.reshape(rows, _LANE)
    onehot2d = onehot_flat.reshape(rows, _LANE)

    itemsize = jnp.dtype(y_pred.dtype).itemsize
    cost = pl.CostEstimate(
        flops=16 * rows * _LANE,
        transcendentals=2 * rows * _LANE,                     # exp + log per lane
        bytes_accessed=rows * _LANE * (itemsize + 1) + num_tiles * _LANE * 4,
    )

    partials = pl.pallas_call(
        functools.partial(_ce_partials_kernel, num_classes=c,
                          n_valid=flat_n, tile_rows=tile_rows),
        out_shape=jax.ShapeDtypeStruct((num_tiles, _LANE), jnp.float32),
        grid=(num_tiles,),
        in_specs=[
            pl.BlockSpec((tile_rows, _LANE), lambda i: (i, 0)),   # packed logits
            pl.BlockSpec((tile_rows, _LANE), lambda i: (i, 0)),   # int8 one-hot mask
        ],
        out_specs=pl.BlockSpec((1, _LANE), lambda i: (i, 0)),     # per-tile lane partials
        compiler_params=pltpu.CompilerParams(
            dimension_semantics=("parallel",),
            vmem_limit_bytes=_VMEM_LIMIT,
        ),
        cost_estimate=cost,
    )(logits2d, onehot2d)

    return jnp.sum(partials) / jnp.float32(n)


# ---------------------------------------------------------------------------
# MSE(weights, prior):  mean((w - prior)**2).
# Tiny tensors (this module: NUM_CLASSES x EMBED_DIM) go through plain jnp;
# large priors use a tiled Pallas reduction with per-tile lane partials.
# ---------------------------------------------------------------------------
def _sqdiff_partials_kernel(w_ref, p_ref, out_ref, *, n_valid, tile_rows):
    i = pl.program_id(0)
    d = w_ref[...].astype(jnp.float32) - p_ref[...].astype(jnp.float32)
    r, l = d.shape
    row = jax.lax.broadcasted_iota(jnp.int32, (r, l), 0)
    lane = jax.lax.broadcasted_iota(jnp.int32, (r, l), 1)
    flat = (i * tile_rows + row) * l + lane
    sq = jnp.where(flat < n_valid, d * d, 0.0)
    out_ref[...] = jnp.sum(sq, axis=0, keepdims=True)


def _mse_mean(w, prior):
    total = int(np.prod(w.shape))
    if total < _MSE_PALLAS_MIN:
        # Tiny regularizer tensors: a separate pallas_call is pure dispatch
        # overhead; XLA fuses this into a single small reduce.
        return jnp.mean((w.astype(jnp.float32) - prior.astype(jnp.float32)) ** 2)

    tail = (-total) % _LANE
    wf = w.reshape(total)
    pf = prior.reshape(total)
    if tail:
        wf = jnp.pad(wf, (0, tail))
        pf = jnp.pad(pf, (0, tail))
    rows = (total + tail) // _LANE
    if rows <= 256:
        tile_rows = rows
    else:
        tile_rows = min(_MSE_TILE_ROWS, _round_up(_cdiv(rows, 2), 32))
    num_tiles = _cdiv(rows, tile_rows)

    partials = pl.pallas_call(
        functools.partial(_sqdiff_partials_kernel, n_valid=total, tile_rows=tile_rows),
        out_shape=jax.ShapeDtypeStruct((num_tiles, _LANE), jnp.float32),
        grid=(num_tiles,),
        in_specs=[
            pl.BlockSpec((tile_rows, _LANE), lambda i: (i, 0)),
            pl.BlockSpec((tile_rows, _LANE), lambda i: (i, 0)),
        ],
        out_specs=pl.BlockSpec((1, _LANE), lambda i: (i, 0)),
        compiler_params=pltpu.CompilerParams(
            dimension_semantics=("parallel",),
            vmem_limit_bytes=_VMEM_LIMIT,
        ),
    )(wf.reshape(rows, _LANE), pf.reshape(rows, _LANE))

    return jnp.sum(partials) / jnp.float32(total)


# ---------------------------------------------------------------------------
# Public wrapper: CustomCriterion.forward(y_pred, y_true, model)
# ---------------------------------------------------------------------------
def custom_criterion(y_pred, y_true, model_weights=None, prior_weights=None, _lambda=0.1):
    loss = _cross_entropy_mean(y_pred, y_true)
    if model_weights is not None:
        prior = prior_weights if prior_weights is not None else jnp.zeros_like(model_weights)
        loss = loss + jnp.float32(_lambda) * _mse_mean(model_weights, prior)
    return loss


def _reference(y_pred, y_true, w, prior, lam):
    logp = jax.nn.log_softmax(y_pred.astype(jnp.float32), axis=-1)
    ce = -jnp.mean(logp[jnp.arange(y_pred.shape[0]), y_true])
    mse = jnp.mean((w.astype(jnp.float32) - prior.astype(jnp.float32)) ** 2)
    return ce + lam * mse


if __name__ == "__main__":
    NUM_CLASSES = 4
    EMBED_DIM = 32
    BATCH = 8
    LAM = 0.1

    key = jax.random.PRNGKey(0)
    k1, k2, k3, k4, k5, k6 = jax.random.split(key, 6)

    # y_pred: logits from the head; y_true: integer class labels.
    y_pred = jax.random.normal(k1, (BATCH, NUM_CLASSES), dtype=jnp.float32)
    y_true = jax.random.randint(k2, (BATCH,), 0, NUM_CLASSES, dtype=jnp.int32)

    # Deterministic synthetic parameters: ZeroShotHead._weights for the trained
    # model and for the frozen base_model (the prior).
    model_weights = jax.random.normal(k3, (NUM_CLASSES, EMBED_DIM), dtype=jnp.float32)
    prior_weights = model_weights + 0.05 * jax.random.normal(
        k4, (NUM_CLASSES, EMBED_DIM), dtype=jnp.float32)

    loss = custom_criterion(y_pred, y_true, model_weights, prior_weights, LAM)
    loss = jax.block_until_ready(loss)
    ref = _reference(y_pred, y_true, model_weights, prior_weights, LAM)
    np.testing.assert_allclose(np.asarray(loss), np.asarray(ref), rtol=1e-5, atol=1e-5)

    # Extra validation of paths the small demo doesn't reach:
    # (a) multi-tile CE grid with a ragged tail and a partial last block,
    nb = 70000
    yp_big = jax.random.normal(k5, (nb, NUM_CLASSES), dtype=jnp.float32)
    yt_big = jax.random.randint(k6, (nb,), 0, NUM_CLASSES, dtype=jnp.int32)
    ce_big = jax.block_until_ready(_cross_entropy_mean(yp_big, yt_big))
    logp_big = jax.nn.log_softmax(yp_big, axis=-1)
    ce_big_ref = -jnp.mean(jnp.take_along_axis(logp_big, yt_big[:, None], axis=1))
    np.testing.assert_allclose(np.asarray(ce_big), np.asarray(ce_big_ref),
                               rtol=1e-4, atol=1e-5)

    # (b) the tiled Pallas MSE path for large regularizer tensors.
    w_big = jax.random.normal(k3, (3000, 300), dtype=jnp.float32)
    p_big = w_big + 0.01 * jax.random.normal(k4, (3000, 300), dtype=jnp.float32)
    mse_big = jax.block_until_ready(_mse_mean(w_big, p_big))
    mse_big_ref = jnp.mean((w_big - p_big) ** 2)
    np.testing.assert_allclose(np.asarray(mse_big), np.asarray(mse_big_ref),
                               rtol=1e-4, atol=1e-8)

    print("KERNEL_OK")
</pallas_src>

<mosaic_0001>
module attributes {stable_mosaic.version = 11 : i64} {
  func.func @_ce_partials_kernel(%arg0: i32, %arg1: memref<1x128xf32, #tpu.memory_space<vmem>>, %arg2: memref<1x128xi8, #tpu.memory_space<vmem>>, %arg3: memref<1x128xf32, #tpu.memory_space<vmem>>) attributes {dimension_semantics = [#tpu.dimension_semantics<parallel>], iteration_bounds = array<i64: 1>, scalar_prefetch = 0 : i64, scratch_operands = 0 : i64, tpu.core_type = #tpu.core_type<tc>, window_params = [{transform_indices = @transform_0, window_bounds = array<i64: 1, 128>}, {transform_indices = @transform_1, window_bounds = array<i64: 1, 128>}, {transform_indices = @transform_2, window_bounds = array<i64: 1, 128>}]} {
    %c0 = arith.constant 0 : index
    %c0_0 = arith.constant 0 : index
    %0 = vector.load %arg1[%c0, %c0_0] : memref<1x128xf32, #tpu.memory_space<vmem>>, vector<1x128xf32>
    %1 = tpu.iota {dimensions = array<i32: 1>} : vector<1x128xi32>
    %2 = tpu.iota {dimensions = array<i32: 0>} : vector<1x128xi32>
    %3 = tpu.iota {dimensions = array<i32: 1>} : vector<8x128xi32>
    %4 = arith.sitofp %3 : vector<8x128xi32> to vector<8x128xf32>
    %c127_i32 = arith.constant 127 : i32
    %5 = tpu.dynamic_rotate %4 by %c127_i32 dim 1 : vector<8x128xf32>, i32 -> vector<8x128xf32>
    %6 = vector.extract_strided_slice %5 {offsets = [0, 0], sizes = [1, 1], strides = [1, 1]} : vector<8x128xf32> to vector<1x1xf32>
    %cst = arith.constant 1.000000e+00 : f32
    %7 = vector.broadcast %cst : f32 to vector<1x1xf32>
    %8 = arith.cmpf oeq, %6, %7 : vector<1x1xf32>
    %9 = arith.extui %8 : vector<1x1xi1> to vector<1x1xi32>
    %c127_i32_1 = arith.constant 127 : i32
    %10 = tpu.dynamic_rotate %0 by %c127_i32_1 dim 1 : vector<1x128xf32>, i32 -> vector<1x128xf32>
    %c1_i32 = arith.constant 1 : i32
    %11 = tpu.dynamic_rotate %0 by %c1_i32 dim 1 : vector<1x128xf32>, i32 -> vector<1x128xf32>
    %c0_i32 = arith.constant 0 : i32
    %12 = vector.broadcast %c0_i32 : i32 to vector<1x128xi32>
    %13 = arith.shrsi %1, %12 : vector<1x128xi32>
    %c1_i32_2 = arith.constant 1 : i32
    %14 = vector.broadcast %c1_i32_2 : i32 to vector<1x128xi32>
    %15 = arith.andi %13, %14 : vector<1x128xi32>
    %16 = vector.broadcast %9 : vector<1x1xi32> to vector<1x128xi32>
    %17 = arith.xori %15, %16 : vector<1x128xi32>
    %c1_i32_3 = arith.constant 1 : i32
    %18 = vector.broadcast %c1_i32_3 : i32 to vector<1x128xi32>
    %19 = arith.cmpi eq, %17, %18 : vector<1x128xi32>
    %20 = arith.select %19, %10, %11 : vector<1x128xi1>, vector<1x128xf32>
    %21 = arith.maximumf %0, %20 : vector<1x128xf32>
    %c126_i32 = arith.constant 126 : i32
    %22 = tpu.dynamic_rotate %21 by %c126_i32 dim 1 : vector<1x128xf32>, i32 -> vector<1x128xf32>
    %c2_i32 = arith.constant 2 : i32
    %23 = tpu.dynamic_rotate %21 by %c2_i32 dim 1 : vector<1x128xf32>, i32 -> vector<1x128xf32>
    %c1_i32_4 = arith.constant 1 : i32
    %24 = vector.broadcast %c1_i32_4 : i32 to vector<1x128xi32>
    %25 = arith.shrsi %1, %24 : vector<1x128xi32>
    %c1_i32_5 = arith.constant 1 : i32
    %26 = vector.broadcast %c1_i32_5 : i32 to vector<1x128xi32>
    %27 = arith.andi %25, %26 : vector<1x128xi32>
    %28 = vector.broadcast %9 : vector<1x1xi32> to vector<1x128xi32>
    %29 = arith.xori %27, %28 : vector<1x128xi32>
    %c1_i32_6 = arith.constant 1 : i32
    %30 = vector.broadcast %c1_i32_6 : i32 to vector<1x128xi32>
    %31 = arith.cmpi eq, %29, %30 : vector<1x128xi32>
    %32 = arith.select %31, %22, %23 : vector<1x128xi1>, vector<1x128xf32>
    %33 = arith.maximumf %21, %32 : vector<1x128xf32>
    %34 = arith.subf %0, %33 : vector<1x128xf32>
    %35 = math.exp %34 : vector<1x128xf32>
    %c127_i32_7 = arith.constant 127 : i32
    %36 = tpu.dynamic_rotate %35 by %c127_i32_7 dim 1 : vector<1x128xf32>, i32 -> vector<1x128xf32>
    %37 = arith.addf %35, %36 : vector<1x128xf32>
    %c126_i32_8 = arith.constant 126 : i32
    %38 = tpu.dynamic_rotate %37 by %c126_i32_8 dim 1 : vector<1x128xf32>, i32 -> vector<1x128xf32>
    %39 = arith.addf %37, %38 : vector<1x128xf32>
    %40 = math.log %39 : vector<1x128xf32>
    %41 = arith.addf %33, %40 : vector<1x128xf32>
    %c1_i32_9 = arith.constant 1 : i32
    %42 = vector.broadcast %c1_i32_9 : i32 to vector<1x1xi32>
    %43 = arith.subi %42, %9 : vector<1x1xi32>
    %c3_i32 = arith.constant 3 : i32
    %44 = vector.broadcast %c3_i32 : i32 to vector<1x1xi32>
    %45 = arith.muli %43, %44 : vector<1x1xi32>
    %c1_i32_10 = arith.constant 1 : i32
    %46 = arith.muli %arg0, %c1_i32_10 : i32
    %47 = vector.broadcast %46 : i32 to vector<1x128xi32>
    %48 = arith.addi %47, %2 : vector<1x128xi32>
    %c128_i32 = arith.constant 128 : i32
    %49 = vector.broadcast %c128_i32 : i32 to vector<1x128xi32>
    %50 = arith.muli %48, %49 : vector<1x128xi32>
    %51 = arith.addi %50, %1 : vector<1x128xi32>
    %c32_i32 = arith.constant 32 : i32
    %52 = vector.broadcast %c32_i32 : i32 to vector<1x128xi32>
    %53 = arith.cmpi slt, %51, %52 : vector<1x128xi32>
    %c3_i32_11 = arith.constant 3 : i32
    %54 = vector.broadcast %c3_i32_11 : i32 to vector<1x128xi32>
    %55 = arith.andi %1, %54 : vector<1x128xi32>
    %56 = vector.broadcast %45 : vector<1x1xi32> to vector<1x128xi32>
    %57 = arith.cmpi eq, %55, %56 : vector<1x128xi32>
    %58 = arith.andi %53, %57 : vector<1x128xi1>
    %cst_12 = arith.constant 0.000000e+00 : f32
    %59 = vector.broadcast %cst_12 : f32 to vector<1x128xf32>
    %60 = arith.select %58, %41, %59 : vector<1x128xi1>, vector<1x128xf32>
    %c0_13 = arith.constant 0 : index
    %c0_14 = arith.constant 0 : index
    %61 = vector.load %arg2[%c0_13, %c0_14] : memref<1x128xi8, #tpu.memory_space<vmem>>, vector<1x128xi8>
    %c0_i8 = arith.constant 0 : i8
    %62 = vector.broadcast %c0_i8 : i8 to vector<1x128xi8>
    %63 = arith.cmpi ne, %61, %62 : vector<1x128xi8>
    %64 = arith.andi %53, %63 : vector<1x128xi1>
    %cst_15 = arith.constant 0.000000e+00 : f32
    %65 = vector.broadcast %cst_15 : f32 to vector<1x128xf32>
    %66 = arith.select %64, %0, %65 : vector<1x128xi1>, vector<1x128xf32>
    %67 = arith.subf %60, %66 : vector<1x128xf32>
    %cst_16 = arith.constant dense<0.000000e+00> : vector<128xf32>
    %68 = vector.multi_reduction <add>, %67, %cst_16 [0] : vector<1x128xf32> to vector<128xf32>
    %69 = vector.shape_cast %68 : vector<128xf32> to vector<1x128xf32>
    %c0_17 = arith.constant 0 : index
    %c0_18 = arith.constant 0 : index
    %70 = vector.load %arg3[%c0_17, %c0_18] : memref<1x128xf32, #tpu.memory_space<vmem>>, vector<1x128xf32>
    tpu.vector_store %arg3[%c0_17, %c0_18], %69 {strides = array<i32>} : memref<1x128xf32, #tpu.memory_space<vmem>>, vector<1x128xf32>,
    return
  }
  func.func @transform_0(%arg0: i32) -> (i32, i32) {
    %c0_i32 = arith.constant 0 : i32
    %c0_i32_0 = arith.constant 0 : i32
    return %arg0, %c0_i32 : i32, i32
  }
  func.func @transform_1(%arg0: i32) -> (i32, i32) {
    %c0_i32 = arith.constant 0 : i32
    %c0_i32_0 = arith.constant 0 : i32
    return %arg0, %c0_i32 : i32, i32
  }
  func.func @transform_2(%arg0: i32) -> (i32, i32) {
    %c0_i32 = arith.constant 0 : i32
    %c0_i32_0 = arith.constant 0 : i32
    return %arg0, %c0_i32 : i32, i32
  }
}

</mosaic_0001>

<llo_original>
// kernel: tpu_custom_call.1
$region0: #{tpu_custom_call.1}
  #allocation0 [shape = 'u32[]', space=smem, size = 0x4, offset = 0x4, fixed_abs, tag = 'smem constant byte address 0x4 - core index']
  #allocation1 [shape = 'u32[72,128]{1,0:T(1,128)}', space=vmem, size = 0x9000, scoped, tag = 'internal scratch']
  %s0 = inlined_call_operand.hbm [shape: f32[1,128], index: 0, kind: input, shape index: {}]
  %s1 = inlined_call_operand.hbm [shape: s8[1,128], index: 1, kind: input, shape index: {}]
  %s2 = inlined_call_operand.hbm [shape: f32[1,128], index: 2, kind: output, shape index: {}]
  %s3 = sld [smem:[#allocation0]]
  $region26: #{tpu_custom_call.1} parent=0
    _
  %s5 = ssub.s32 1, %s3
  %s6 = scalar_select 0, %s5, %s3
  $region1: #{tpu_custom_call.1} parent=0
    #allocation2 [shape = 'u8[512]{0}', space=vmem, size = 0x400, scoped, tag = 'input window, operand 0, single buffered']
    #allocation3 [shape = 's32[1]{0}', space=sflag, size = 0x4, scoped, tag = 'scoped memory for tpu_custom_call.1']
    #allocation4 [shape = 's32[1]{0}', space=sflag, size = 0x4, scoped, tag = 'scoped memory for tpu_custom_call.1']
    #allocation5 [shape = 'u8[512]{0}', space=vmem, size = 0x400, scoped, tag = 'input window, operand 1, single buffered']
    #allocation6 [shape = 's32[1]{0}', space=sflag, size = 0x4, scoped, tag = 'scoped memory for tpu_custom_call.1']
    #allocation7 [shape = 'u8[512]{0}', space=vmem, size = 0x400, scoped, tag = 'output window, operand 0, single buffered']
    %7 = vsyncpa [#allocation3], 0
    %8 = vsyncpa [#allocation6], 0
    %9 = vsyncpa [#allocation4], 0
    // Predicated region
    $region2: #{tpu_custom_call.1} parent=1 // pred_check
      _
    $region3: #{tpu_custom_call.1} parent=1 // pred_check_branch
      %11 = sbr.rel (0) target = $region5
    $region4: #{tpu_custom_call.1} parent=1 // pred_region
      %13 = vsyncadd [#allocation3], 0
      %s15 = sshll.u32 %s0, 4
      %s16 = int_to_ptr.hbm [resolvable:$true] %s15
      %s17 = sshll.u32 [#allocation2], 4
      %s18 = int_to_ptr.vmem [resolvable:$true] %s17
      %20 = dma.hbm_to_vmem [thread:$0]  %s16, 16, %s18, [#allocation3]
    $region5: #{tpu_custom_call.1} parent=1 // pred_fallthru
      _
    // Predicated region
    $region6: #{tpu_custom_call.1} parent=1 // pred_check
      _
    $region7: #{tpu_custom_call.1} parent=1 // pred_check_branch
      %22 = sbr.rel (0) target = $region9
    $region8: #{tpu_custom_call.1} parent=1 // pred_region
      %24 = vsyncadd [#allocation6], 0
      %s26 = sshll.u32 %s1, 4
      %s27 = int_to_ptr.hbm [resolvable:$true] %s26
      %s28 = sshll.u32 [#allocation5], 4
      %s29 = int_to_ptr.vmem [resolvable:$true] %s28
      %31 = dma.hbm_to_vmem [thread:$0]  %s27, 16, %s29, [#allocation6]
    $region9: #{tpu_custom_call.1} parent=1 // pred_fallthru
      _
    // Predicated region
    $region10: #{tpu_custom_call.1} parent=1 // pred_check
      _
    $region11: #{tpu_custom_call.1} parent=1 // pred_check_branch
      %33 = sbr.rel (0) target = $region13
    $region12: #{tpu_custom_call.1} parent=1 // pred_region
      %35 = dma.done [#allocation3], 16
    $region13: #{tpu_custom_call.1} parent=1 // pred_fallthru
      _
    // Predicated region
    $region14: #{tpu_custom_call.1} parent=1 // pred_check
      _
    $region15: #{tpu_custom_call.1} parent=1 // pred_check_branch
      %37 = sbr.rel (0) target = $region17
    $region16: #{tpu_custom_call.1} parent=1 // pred_region
      %39 = dma.done [#allocation6], 16
    $region17: #{tpu_custom_call.1} parent=1 // pred_fallthru
      _
    %v42 = vld [vmem:[#allocation2] sm:$0x1]
    %v43 = vlaneseq
    %v44 = vand.u32 %v43, 127
    %v45 = vlaneseq
    %v46 = vshrl.u32 %v45, 7
    %v47 = vcvt.s32.f32 %v44
    %48 = vrot.lane.b32.xlu0 %v47, 127
    %v49 = vpop.permute.xlu0 %48
    %vm50 = vcmp.eq.f32.partialorder %v49, 1.0
    %v51 = vsel %vm50, 1, 0
    %52 = vrot.lane.b32.xlu0 %v42, 127
    %v53 = vpop.permute.xlu0 %52
    %54 = vrot.lane.b32.xlu0 %v42, 1
    %v55 = vpop.permute.xlu0 %54
    %v56 = vand.u32 %v44, 1
    %57 = vset.pattern.permute.xlu0 0
    %58 = vperm.xlu0 %57, %v51
    %v59 = vpop.permute.xlu0 %58
    %v60 = vxor.u32 %v56, %v59
    %vm61 = vcmp.eq.s32.totalorder %v60, 1
    %v62 = vsel %vm61, %v53, %v55
    %v63 = vmax.f32 %v42, %v62
    %64 = vrot.lane.b32.xlu0 %v63, 126
    %v65 = vpop.permute.xlu0 %64
    %66 = vrot.lane.b32.xlu0 %v63, 2
    %v67 = vpop.permute.xlu0 %66
    %v68 = vshra.s32 %v44, 1
    %v69 = vand.u32 %v68, 1
    %v70 = vxor.u32 %v69, %v59
    %vm71 = vcmp.eq.s32.totalorder %v70, 1
    %v72 = vsel %vm71, %v65, %v67
    %v73 = vmax.f32 %v63, %v72
    %v74 = vsub.f32 %v42, %v73
    %v75 = vmul.f32 %v74, 1.442695
    %v76 = vpow.pop %v75
    %77 = vrot.lane.b32.xlu0 %v76, 127
    %v78 = vpop.permute.xlu0 %77
    %v79 = vadd.f32 %v76, %v78
    %80 = vrot.lane.b32.xlu0 %v79, 126
    %v81 = vpop.permute.xlu0 %80
    %v82 = vadd.f32 %v79, %v81
    %v83 = vlog2.pop %v82
    %v84 = vmul.f32 %v83, 0.6931472
    %v85 = vadd.f32 %v73, %v84
    %v86 = vsub.s32 1, %v51
    %v87 = vmul.u32 %v86, 3
    %v88 = vstv 0
    %v89 = vadd.s32 %v88, %v46
    %v90 = vmul.u32 %v89, 128
    %v91 = vadd.s32 %v90, %v44
    %vm92 = vcmp.lt.s32.totalorder %v91, 32
    %v93 = vand.u32 %v44, 3
    %94 = vset.pattern.permute.xlu0 0
    %95 = vperm.xlu0 %94, %v87
    %v96 = vpop.permute.xlu0 %95
    %vm97 = vcmp.eq.s32.totalorder %v93, %v96
    %vm98 = vmand %vm92, %vm97
    %v99 = vsel %vm98, %v85, 0.0
    %v100 = vld [vmem:[#allocation5] sm:$0x1]
    %vm101 = vnez %v100
    %v102 = vsel %vm101, 16843009, 0
    %v103 = vunpack.c.0.s8 %v102
    %vm104 = vcmp.ne.s32.totalorder %v103, 0
    %vm105 = vmand %vm92, %vm104
    %v106 = vsel %vm105, %v42, 0.0
    %v107 = vsub.f32 %v99, %v106
    %v108 = vadd.f32 %v107, 0.0
    %109 = vst [vmem:[#allocation7] sm:$0x1] %v108
    // Predicated region
    $region18: #{tpu_custom_call.1} parent=1 // pred_check
      _
    $region19: #{tpu_custom_call.1} parent=1 // pred_check_branch
      %111 = sbr.rel (0) target = $region21
    $region20: #{tpu_custom_call.1} parent=1 // pred_region
      %113 = vsyncadd [#allocation4], 0
      %s115 = sshll.u32 [#allocation7], 4
      %s116 = int_to_ptr.vmem [resolvable:$true] %s115
      %s117 = sshll.u32 %s2, 4
      %s118 = int_to_ptr.hbm [resolvable:$true] %s117
      %120 = dma.vmem_to_hbm [thread:$0]  %s116, 16, %s118, [#allocation4]
    $region21: #{tpu_custom_call.1} parent=1 // pred_fallthru
      _
    // Predicated region
    $region22: #{tpu_custom_call.1} parent=1 // pred_check
      _
    $region23: #{tpu_custom_call.1} parent=1 // pred_check_branch
      %122 = sbr.rel (0) target = $region25
    $region24: #{tpu_custom_call.1} parent=1 // pred_region
      %124 = dma.done [#allocation4], 16
    $region25: #{tpu_custom_call.1} parent=1 // pred_fallthru
      _
    %125 = vsyncpa [#allocation3], 1
    %126 = vsyncpa [#allocation6], 1
    %127 = vsyncpa [#allocation4], 1

</llo_original>
